<compile_context>
chip_gen: v6e
topology: v6e:2x2x1
jax: 0.10.0
libtpu: 0.0.40
codegen_flags: <defaults>
</compile_context>

<pallas_src>
import functools

import jax
import jax.numpy as jnp
from jax.experimental import pallas as pl
from jax.experimental.pallas import tpu as pltpu  # noqa: F401  (kept for CompilerParams if tiled)

BN_EPS = 1e-5


# --------------------------- Pallas kernel -----------------------------------

def fused_conv_bn_relu_kernel(pT_ref, w_ref, g_ref, b_ref, o_ref):
    # pT_ref: (K, M)      im2col patches, transposed -> M (output pixels) is the
    #                     lane-dense last axis. K = C_in*kH*kW, feature order
    #                     (c, kh, kw) matching the OIHW weight flatten.
    # w_ref : (C_out, K)  flattened Conv2d weight.
    # g_ref : (C_out, 1)  BatchNorm gamma (column -> broadcasts along lanes).
    # b_ref : (C_out, 1)  BatchNorm beta.
    # o_ref : (C_out, M)  fused Conv -> BN(batch stats) -> ReLU output.
    #
    # Conv bias is intentionally omitted: a per-channel constant added before a
    # training-mode BatchNorm is exactly cancelled by the mean subtraction.
    y = jnp.dot(w_ref[...], pT_ref[...], preferred_element_type=jnp.float32)

    # BatchNorm2d training-mode forward: per-channel mean / biased variance over
    # the M = N*Ho*Wo axis (lanes), then affine + ReLU.
    mean = jnp.mean(y, axis=1, keepdims=True)                # (C_out, 1)
    var = jnp.mean((y - mean) ** 2, axis=1, keepdims=True)   # biased, as PyTorch
    scale = jax.lax.rsqrt(var + BN_EPS) * g_ref[...]         # (C_out, 1)
    o_ref[...] = jnp.maximum((y - mean) * scale + b_ref[...], 0.0)

    # TODO(synk): for production M (large N*Ho*Wo) this single-block form would
    # exceed v7x's 64 MiB VMEM and use one TensorCore only; tile over M with a
    # "parallel" grid axis, accumulate per-channel sum/sumsq in VMEM scratch
    # (pl.when init/finalize), and normalize in a second lightweight pass.


# ------------------------------ glue (JAX) ------------------------------------

def im2col_T(x, k, stride, padding):
    """x: [N, C, H, W] -> patches^T [C*k*k, N*Ho*Wo], features ordered (c, kh, kw),
    M ordered (n, ho, wo)."""
    N, C, H, W = x.shape
    xp = jnp.pad(x, ((0, 0), (0, 0), (padding, padding), (padding, padding)))
    Ho = (H + 2 * padding - k) // stride + 1
    Wo = (W + 2 * padding - k) // stride + 1
    cols = []
    for kh in range(k):
        for kw in range(k):
            cols.append(
                xp[:, :, kh:kh + stride * Ho:stride, kw:kw + stride * Wo:stride]
            )
    cols = jnp.stack(cols, axis=0).reshape(k, k, N, C, Ho, Wo)
    cols = cols.transpose(3, 0, 1, 2, 4, 5)            # [C, kh, kw, N, Ho, Wo]
    return cols.reshape(C * k * k, N * Ho * Wo), Ho, Wo
    # TODO(synk): at real sizes the k*k-expanded im2col HBM copy dominates DMA
    # traffic; replace with in-kernel shifted (C_in x M) matmul accumulation (or
    # at minimum feed bf16 patches/weights with f32 accumulation).


@functools.partial(jax.jit, static_argnames=("stride", "padding"))
def conv_block_forward(x, weight, bias, gamma, beta, *, stride, padding):
    """ConvBlock forward: Conv2d -> BatchNorm2d (batch stats) -> ReLU.

    `bias` is accepted for interface parity with nn.Conv2d but not used in the
    kernel: it is mathematically cancelled by the training-mode BatchNorm mean
    subtraction (and init_weights zeroes it)."""
    del bias
    N, C_in, H, W = x.shape
    C_out, _, kH, kW = weight.shape

    pT, Ho, Wo = im2col_T(x, kH, stride, padding)      # [K, M]
    K, M = pT.shape
    w2d = weight.reshape(C_out, C_in * kH * kW)        # [C_out, K]

    y = pl.pallas_call(
        fused_conv_bn_relu_kernel,
        out_shape=jax.ShapeDtypeStruct((C_out, M), jnp.float32),
    )(pT, w2d, gamma.reshape(C_out, 1), beta.reshape(C_out, 1))

    # [C_out, M] (M in (n, ho, wo) order) -> NCHW.
    return y.reshape(C_out, N, Ho, Wo).transpose(1, 0, 2, 3)


# ------------------------------- main -----------------------------------------

if __name__ == "__main__":
    # ConvBlock(in_channels=4, out_channels=8, kernel_size=3, stride=1,
    #           padding=1, activation='relu', weight_init='xavier_uniform')
    N, C_in, H, W = 2, 4, 16, 16
    C_out, k, stride, padding = 8, 3, 1, 1

    key = jax.random.PRNGKey(0)
    kx, kw = jax.random.split(key)

    x = jax.random.normal(kx, (N, C_in, H, W), dtype=jnp.float32)

    # xavier_uniform_ for Conv2d weight [C_out, C_in, kH, kW]; bias zeroed.
    fan_in = C_in * k * k
    fan_out = C_out * k * k
    bound = (6.0 / (fan_in + fan_out)) ** 0.5
    weight = jax.random.uniform(
        kw, (C_out, C_in, k, k), minval=-bound, maxval=bound, dtype=jnp.float32
    )
    bias = jnp.zeros((C_out,), jnp.float32)
    # BatchNorm2d affine params (PyTorch default init: gamma=1, beta=0).
    gamma = jnp.ones((C_out,), jnp.float32)
    beta = jnp.zeros((C_out,), jnp.float32)

    out = conv_block_forward(
        x, weight, bias, gamma, beta, stride=stride, padding=padding
    )
    out = jax.block_until_ready(out)

    # Reference check against plain-JAX conv + batchnorm + relu.
    ref_conv = jax.lax.conv_general_dilated(
        x, weight, (stride, stride),
        [(padding, padding), (padding, padding)],
        dimension_numbers=("NCHW", "OIHW", "NCHW"),
    ) + bias.reshape(1, -1, 1, 1)
    m = ref_conv.mean(axis=(0, 2, 3), keepdims=True)
    v = ((ref_conv - m) ** 2).mean(axis=(0, 2, 3), keepdims=True)
    ref = jnp.maximum(
        (ref_conv - m) * jax.lax.rsqrt(v + BN_EPS) * gamma.reshape(1, -1, 1, 1)
        + beta.reshape(1, -1, 1, 1),
        0.0,
    )
    assert out.shape == (N, C_out, H, W)
    assert jnp.allclose(out, ref, atol=1e-4, rtol=1e-4)

    print("KERNEL_OK")
</pallas_src>

<mosaic_0001>
module attributes {stable_mosaic.version = 11 : i64} {
  func.func @fused_conv_bn_relu_kernel(%arg0: memref<36x512xf32, #tpu.memory_space<vmem>>, %arg1: memref<8x36xf32, #tpu.memory_space<vmem>>, %arg2: memref<8x1xf32, #tpu.memory_space<vmem>>, %arg3: memref<8x1xf32, #tpu.memory_space<vmem>>, %arg4: memref<8x512xf32, #tpu.memory_space<vmem>>) attributes {dimension_semantics = [], scalar_prefetch = 0 : i64, scratch_operands = 0 : i64, tpu.core_type = #tpu.core_type<tc>} {
    %c0 = arith.constant 0 : index
    %c0_0 = arith.constant 0 : index
    %0 = vector.load %arg1[%c0, %c0_0] : memref<8x36xf32, #tpu.memory_space<vmem>>, vector<8x36xf32>
    %c0_1 = arith.constant 0 : index
    %c0_2 = arith.constant 0 : index
    %1 = vector.load %arg0[%c0_1, %c0_2] : memref<36x512xf32, #tpu.memory_space<vmem>>, vector<36x512xf32>
    %cst = arith.constant dense<0.000000e+00> : vector<8x512xf32>
    %2 = tpu.matmul %0, %1, %cst {dimension_numbers = #tpu.dot_dimension_numbers<[1], [0], [0], [1], [0, 0, 1, 1], [], []>} : vector<8x36xf32>, vector<36x512xf32>, vector<8x512xf32> -> vector<8x512xf32>
    %cst_3 = arith.constant dense<0.000000e+00> : vector<8xf32>
    %3 = vector.multi_reduction <add>, %2, %cst_3 [1] : vector<8x512xf32> to vector<8xf32>
    %4 = vector.shape_cast %3 : vector<8xf32> to vector<8x1xf32>
    %cst_4 = arith.constant 5.120000e+02 : f32
    %5 = vector.broadcast %cst_4 : f32 to vector<8x1xf32>
    %6 = arith.divf %4, %5 : vector<8x1xf32>
    %7 = vector.broadcast %6 : vector<8x1xf32> to vector<8x512xf32>
    %8 = arith.subf %2, %7 : vector<8x512xf32>
    %9 = arith.mulf %8, %8 : vector<8x512xf32>
    %cst_5 = arith.constant dense<0.000000e+00> : vector<8xf32>
    %10 = vector.multi_reduction <add>, %9, %cst_5 [1] : vector<8x512xf32> to vector<8xf32>
    %11 = vector.shape_cast %10 : vector<8xf32> to vector<8x1xf32>
    %cst_6 = arith.constant 5.120000e+02 : f32
    %12 = vector.broadcast %cst_6 : f32 to vector<8x1xf32>
    %13 = arith.divf %11, %12 : vector<8x1xf32>
    %cst_7 = arith.constant 9.99999974E-6 : f32
    %14 = vector.broadcast %cst_7 : f32 to vector<8x1xf32>
    %15 = arith.addf %13, %14 : vector<8x1xf32>
    %16 = math.rsqrt %15 : vector<8x1xf32>
    %c0_8 = arith.constant 0 : index
    %c0_9 = arith.constant 0 : index
    %17 = vector.load %arg2[%c0_8, %c0_9] : memref<8x1xf32, #tpu.memory_space<vmem>>, vector<8x1xf32>
    %18 = arith.mulf %16, %17 : vector<8x1xf32>
    %19 = vector.broadcast %6 : vector<8x1xf32> to vector<8x512xf32>
    %20 = arith.subf %2, %19 : vector<8x512xf32>
    %21 = vector.broadcast %18 : vector<8x1xf32> to vector<8x512xf32>
    %22 = arith.mulf %20, %21 : vector<8x512xf32>
    %c0_10 = arith.constant 0 : index
    %c0_11 = arith.constant 0 : index
    %23 = vector.load %arg3[%c0_10, %c0_11] : memref<8x1xf32, #tpu.memory_space<vmem>>, vector<8x1xf32>
    %24 = vector.broadcast %23 : vector<8x1xf32> to vector<8x512xf32>
    %25 = arith.addf %22, %24 : vector<8x512xf32>
    %cst_12 = arith.constant 0.000000e+00 : f32
    %26 = vector.broadcast %cst_12 : f32 to vector<8x512xf32>
    %27 = arith.maximumf %25, %26 : vector<8x512xf32>
    %c0_13 = arith.constant 0 : index
    %c0_14 = arith.constant 0 : index
    %28 = vector.load %arg4[%c0_13, %c0_14] : memref<8x512xf32, #tpu.memory_space<vmem>>, vector<8x512xf32>
    tpu.vector_store %arg4[%c0_13, %c0_14], %27 {strides = array<i32>} : memref<8x512xf32, #tpu.memory_space<vmem>>, vector<8x512xf32>,
    return
  }
}

</mosaic_0001>

<llo_original>
// kernel: conv_block_forward.1
$region0: #{conv_block_forward.1}
  #allocation0 [shape = 'u32[]', space=smem, size = 0x4, offset = 0x4, fixed_abs, tag = 'smem constant byte address 0x4 - core index']
  #allocation1 [shape = 'u32[144,128]{1,0:T(1,128)}', space=vmem, size = 0x12000, scoped, tag = 'internal scratch']
  %s0 = inlined_call_operand.vmem [shape: f32[36,512], index: 0, kind: input, shape index: {}]
  %s1 = inlined_call_operand.vmem [shape: f32[8,36], index: 1, kind: input, shape index: {}]
  %s2 = inlined_call_operand.vmem [shape: f32[8,1], index: 2, kind: input, shape index: {}]
  %s3 = inlined_call_operand.vmem [shape: f32[8,1], index: 3, kind: input, shape index: {}]
  %s4 = inlined_call_operand.vmem [shape: f32[8,512], index: 4, kind: output, shape index: {}]
  %s5 = sld [smem:[#allocation0]]
  $region26: #{conv_block_forward.1} parent=0
    _
  %s7 = ssub.s32 1, %s5
  %s8 = scalar_select 0, %s7, %s5
  // Predicated region
  $region2: #{conv_block_forward.1} parent=0 // pred_check
    _
  $region3: #{conv_block_forward.1} parent=0 // pred_check_branch
    %10 = sbr.rel (0) target = $region5
  $region4: #{conv_block_forward.1} parent=0 // pred_region
    _
  $region5: #{conv_block_forward.1} parent=0 // pred_fallthru
    _
  // Predicated region
  $region6: #{conv_block_forward.1} parent=0 // pred_check
    _
  $region7: #{conv_block_forward.1} parent=0 // pred_check_branch
    %12 = sbr.rel (0) target = $region9
  $region8: #{conv_block_forward.1} parent=0 // pred_region
    _
  $region9: #{conv_block_forward.1} parent=0 // pred_fallthru
    _
  // Predicated region
  $region10: #{conv_block_forward.1} parent=0 // pred_check
    _
  $region11: #{conv_block_forward.1} parent=0 // pred_check_branch
    %14 = sbr.rel (0) target = $region13
  $region12: #{conv_block_forward.1} parent=0 // pred_region
    _
  $region13: #{conv_block_forward.1} parent=0 // pred_fallthru
    _
  // Predicated region
  $region14: #{conv_block_forward.1} parent=0 // pred_check
    _
  $region15: #{conv_block_forward.1} parent=0 // pred_check_branch
    %16 = sbr.rel (0) target = $region17
  $region16: #{conv_block_forward.1} parent=0 // pred_region
    _
  $region17: #{conv_block_forward.1} parent=0 // pred_fallthru
    _
  %v17 = vld [vmem:[%s1] sm:$0xff]
  %v18 = vld [vmem:[%s0] sm:$0xff]
  %v19 = vld [vmem:[%s0 + $0x8] sm:$0xff]
  %v20 = vld [vmem:[%s0 + $0x10] sm:$0xff]
  %v21 = vld [vmem:[%s0 + $0x18] sm:$0xff]
  %v22 = vld [vmem:[%s0 + $0x20] sm:$0xff]
  %v23 = vld [vmem:[%s0 + $0x28] sm:$0xff]
  %v24 = vld [vmem:[%s0 + $0x30] sm:$0xff]
  %v25 = vld [vmem:[%s0 + $0x38] sm:$0xff]
  %v26 = vld [vmem:[%s0 + $0x40] sm:$0xff]
  %v27 = vld [vmem:[%s0 + $0x48] sm:$0xff]
  %v28 = vld [vmem:[%s0 + $0x50] sm:$0xff]
  %v29 = vld [vmem:[%s0 + $0x58] sm:$0xff]
  %v30 = vld [vmem:[%s0 + $0x60] sm:$0xff]
  %v31 = vld [vmem:[%s0 + $0x68] sm:$0xff]
  %v32 = vld [vmem:[%s0 + $0x70] sm:$0xff]
  %v33 = vld [vmem:[%s0 + $0x78] sm:$0xff]
  %v34 = vld [vmem:[%s0 + $0x80] sm:$0xf]
  %v35 = vld [vmem:[%s0 + $0x88] sm:$0xf]
  %v36 = vld [vmem:[%s0 + $0x90] sm:$0xf]
  %v37 = vld [vmem:[%s0 + $0x98] sm:$0xf]
  %vm38 = vcmask 293888
  %v40 = vsel %vm38, %v17, 0
  %vm42 = vcmask 1043456
  %v44 = vsel %vm42, %v34, 0
  %v47 = vsel %vm42, %v35, 0
  %v50 = vsel %vm42, %v36, 0
  %v53 = vsel %vm42, %v37, 0
  %55 = vmatprep.subr.mxu0 0.0
  %56 = vmatpush1.msra.mxu0 0.0
  %57 = vmatprep.subr.mxu0 0.0
  %58 = vmatpush1.msra.mxu0 0.0
  %59 = vmatprep.subr.mxu0 0.0
  %60 = vmatpush1.msra.mxu0 0.0
  %61 = vmatprep.subr.mxu0 0.0
  %62 = vmatpush1.msra.mxu0 0.0
  %63 = vmatprep.subr.mxu0 0.0
  %64 = vmatpush1.msra.mxu0 0.0
  %65 = vmatprep.subr.mxu0 0.0
  %66 = vmatpush1.msra.mxu0 0.0
  %67 = vmatprep.subr.mxu0 0.0
  %68 = vmatpush1.msra.mxu0 0.0
  %69 = vmatprep.subr.mxu0 0.0
  %70 = vmatpush1.msra.mxu0 0.0
  %71 = vmatprep.subr.mxu0 0.0
  %72 = vmatpush1.msra.mxu0 0.0
  %73 = vmatprep.subr.mxu0 0.0
  %74 = vmatpush1.msra.mxu0 0.0
  %75 = vmatprep.subr.mxu0 0.0
  %76 = vmatpush1.msra.mxu0 0.0
  %77 = vmatprep.subr.mxu0 %v47
  %78 = vmatpush1.msra.mxu0 %v44
  %79 = vmatprep.subr.mxu0 %v31
  %80 = vmatpush1.msra.mxu0 %v30
  %81 = vmatprep.subr.mxu0 %v27
  %82 = vmatpush1.msra.mxu0 %v26
  %83 = vmatprep.subr.mxu0 %v23
  %84 = vmatpush1.msra.mxu0 %v22
  %85 = vmatprep.subr.mxu0 %v19
  %86 = vmatpush1.msra.mxu0 %v18
  %87 = vmatprep.subr.mxu0 0.0
  %88 = vmatpush2.msra.mxu0 0.0
  %89 = vmatprep.subr.mxu0 0.0
  %90 = vmatpush2.msra.mxu0 0.0
  %91 = vmatprep.subr.mxu0 0.0
  %92 = vmatpush2.msra.mxu0 0.0
  %93 = vmatprep.subr.mxu0 0.0
  %94 = vmatpush2.msra.mxu0 0.0
  %95 = vmatprep.subr.mxu0 0.0
  %96 = vmatpush2.msra.mxu0 0.0
  %97 = vmatprep.subr.mxu0 0.0
  %98 = vmatpush2.msra.mxu0 0.0
  %99 = vmatprep.subr.mxu0 0.0
  %100 = vmatpush2.msra.mxu0 0.0
  %101 = vmatprep.subr.mxu0 0.0
  %102 = vmatpush2.msra.mxu0 0.0
  %103 = vmatprep.subr.mxu0 0.0
  %104 = vmatpush2.msra.mxu0 0.0
  %105 = vmatprep.subr.mxu0 0.0
  %106 = vmatpush2.msra.mxu0 0.0
  %107 = vmatprep.subr.mxu0 0.0
  %108 = vmatpush2.msra.mxu0 0.0
  %109 = vmatprep.subr.mxu0 0.0
  %110 = vmatpush2.msra.mxu0 0.0
  %111 = vmatprep.subr.mxu0 0.0
  %112 = vmatpush2.msra.mxu0 0.0
  %113 = vmatprep.subr.mxu0 0.0
  %114 = vmatpush2.msra.mxu0 0.0
  %115 = vmatprep.subr.mxu0 0.0
  %116 = vmatpush2.msra.mxu0 0.0
  %117 = vmatprep.subr.mxu0 0.0
  %118 = vmatpush2.msra.mxu0 0.0
  %119 = vmatprep.mubr.f32.mxu0 0.0
  %120 = vmatmul.mubr.f32.gmra.mxu0 %v40
  %v121 = vpop.f32.mrf.mxu0
  %v122 = vadd.f32 0.0, %v121
  %v123 = vpop.f32.mrf.mxu0
  %v124 = vadd.f32 0.0, %v123
  %125 = vdwg.mxu0
  %126 = vmatprep.subr.mxu0 0.0
  %127 = vmatpush1.msra.mxu0 0.0
  %128 = vmatprep.subr.mxu0 0.0
  %129 = vmatpush1.msra.mxu0 0.0
  %130 = vmatprep.subr.mxu0 0.0
  %131 = vmatpush1.msra.mxu0 0.0
  %132 = vmatprep.subr.mxu0 0.0
  %133 = vmatpush1.msra.mxu0 0.0
  %134 = vmatprep.subr.mxu0 0.0
  %135 = vmatpush1.msra.mxu0 0.0
  %136 = vmatprep.subr.mxu0 0.0
  %137 = vmatpush1.msra.mxu0 0.0
  %138 = vmatprep.subr.mxu0 0.0
  %139 = vmatpush1.msra.mxu0 0.0
  %140 = vmatprep.subr.mxu0 0.0
  %141 = vmatpush1.msra.mxu0 0.0
  %142 = vmatprep.subr.mxu0 0.0
  %143 = vmatpush1.msra.mxu0 0.0
  %144 = vmatprep.subr.mxu0 0.0
  %145 = vmatpush1.msra.mxu0 0.0
  %146 = vmatprep.subr.mxu0 0.0
  %147 = vmatpush1.msra.mxu0 0.0
  %148 = vmatprep.subr.mxu0 %v53
  %149 = vmatpush1.msra.mxu0 %v50
  %150 = vmatprep.subr.mxu0 %v33
  %151 = vmatpush1.msra.mxu0 %v32
  %152 = vmatprep.subr.mxu0 %v29
  %153 = vmatpush1.msra.mxu0 %v28
  %154 = vmatprep.subr.mxu0 %v25
  %155 = vmatpush1.msra.mxu0 %v24
  %156 = vmatprep.subr.mxu0 %v21
  %157 = vmatpush1.msra.mxu0 %v20
  %158 = vmatprep.subr.mxu0 0.0
  %159 = vmatpush2.msra.mxu0 0.0
  %160 = vmatprep.subr.mxu0 0.0
  %161 = vmatpush2.msra.mxu0 0.0
  %162 = vmatprep.subr.mxu0 0.0
  %163 = vmatpush2.msra.mxu0 0.0
  %164 = vmatprep.subr.mxu0 0.0
  %165 = vmatpush2.msra.mxu0 0.0
  %166 = vmatprep.subr.mxu0 0.0
  %167 = vmatpush2.msra.mxu0 0.0
  %168 = vmatprep.subr.mxu0 0.0
  %169 = vmatpush2.msra.mxu0 0.0
  %170 = vmatprep.subr.mxu0 0.0
  %171 = vmatpush2.msra.mxu0 0.0
  %172 = vmatprep.subr.mxu0 0.0
  %173 = vmatpush2.msra.mxu0 0.0
  %174 = vmatprep.subr.mxu0 0.0
  %175 = vmatpush2.msra.mxu0 0.0
  %176 = vmatprep.subr.mxu0 0.0
  %177 = vmatpush2.msra.mxu0 0.0
  %178 = vmatprep.subr.mxu0 0.0
  %179 = vmatpush2.msra.mxu0 0.0
  %180 = vmatprep.subr.mxu0 0.0
  %181 = vmatpush2.msra.mxu0 0.0
  %182 = vmatprep.subr.mxu0 0.0
  %183 = vmatpush2.msra.mxu0 0.0
  %184 = vmatprep.subr.mxu0 0.0
  %185 = vmatpush2.msra.mxu0 0.0
  %186 = vmatprep.subr.mxu0 0.0
  %187 = vmatpush2.msra.mxu0 0.0
  %188 = vmatprep.subr.mxu0 0.0
  %189 = vmatpush2.msra.mxu0 0.0
  %190 = vmatprep.mubr.f32.mxu0 0.0
  %191 = vmatmul.mubr.f32.gmra.mxu0 %v40
  %v192 = vpop.f32.mrf.mxu0
  %v193 = vadd.f32 0.0, %v192
  %v194 = vpop.f32.mrf.mxu0
  %v195 = vadd.f32 0.0, %v194
  %196 = vdwg.mxu0
  %v197 = vadd.f32 %v122, %v124
  %v198 = vadd.f32 %v197, %v193
  %v199 = vadd.f32 %v198, %v195
  %200 = vadd.xlane.f32.xlu0 %v199
  %v201 = vpop.xlane.xlu0 %200
  %v202 = vrcp.pop 512.0
  %v203 = vmul.f32 %v201, %v202
  %v204 = vsub.f32 %v122, %v203
  %v205 = vsub.f32 %v124, %v203
  %v206 = vsub.f32 %v193, %v203
  %v207 = vsub.f32 %v195, %v203
  %v208 = vmul.f32 %v204, %v204
  %v209 = vmul.f32 %v205, %v205
  %v210 = vmul.f32 %v206, %v206
  %v211 = vmul.f32 %v207, %v207
  %v212 = vadd.f32 %v208, %v209
  %v213 = vadd.f32 %v212, %v210
  %v214 = vadd.f32 %v213, %v211
  %215 = vadd.xlane.f32.xlu0 %v214
  %v216 = vpop.xlane.xlu0 %215
  %v217 = vmul.f32 %v216, %v202
  %v218 = vadd.f32 %v217, 1e-05
  %v219 = vrsqrt.pop %v218
  %v220 = vld [vmem:[%s2] sm:$0xff]
  %v221 = vmul.f32 %v219, %v220
  %223 = vset.pattern.permute.xlu0 0
  %224 = vperm.xlu0 %223, %v221
  %v225 = vpop.permute.xlu0 %224
  %v227 = vmul.f32 %v204, %v225
  %v228 = vmul.f32 %v205, %v225
  %v229 = vmul.f32 %v206, %v225
  %v230 = vmul.f32 %v207, %v225
  %v231 = vld [vmem:[%s3] sm:$0xff]
  %233 = vset.pattern.permute.xlu0 0
  %234 = vperm.xlu0 %233, %v231
  %v235 = vpop.permute.xlu0 %234
  %v237 = vadd.f32 %v227, %v235
  %v238 = vadd.f32 %v228, %v235
  %v239 = vadd.f32 %v229, %v235
  %v240 = vadd.f32 %v230, %v235
  %v241 = vmax.f32 %v237, 0.0
  %v242 = vmax.f32 %v238, 0.0
  %v243 = vmax.f32 %v239, 0.0
  %v244 = vmax.f32 %v240, 0.0
  %245 = vst [vmem:[%s4] sm:$0xff] %v241
  %246 = vst [vmem:[%s4 + $0x8] sm:$0xff] %v242
  %247 = vst [vmem:[%s4 + $0x10] sm:$0xff] %v243
  %248 = vst [vmem:[%s4 + $0x18] sm:$0xff] %v244
  // Predicated region
  $region18: #{conv_block_forward.1} parent=0 // pred_check
    _
  $region19: #{conv_block_forward.1} parent=0 // pred_check_branch
    %250 = sbr.rel (0) target = $region21
  $region20: #{conv_block_forward.1} parent=0 // pred_region
    _
  $region21: #{conv_block_forward.1} parent=0 // pred_fallthru
    _
  // Predicated region
  $region22: #{conv_block_forward.1} parent=0 // pred_check
    _
  $region23: #{conv_block_forward.1} parent=0 // pred_check_branch
    %252 = sbr.rel (0) target = $region25
  $region24: #{conv_block_forward.1} parent=0 // pred_region
    _
  $region25: #{conv_block_forward.1} parent=0 // pred_fallthru
    _

</llo_original>
